<compile_context>
chip_gen: v7x
topology: tpu7x:2x2x1
jax: 0.10.0
libtpu: 0.0.40
codegen_flags: <defaults>
</compile_context>

<pallas_src>
import functools

import jax
import jax.numpy as jnp
from jax.experimental import pallas as pl
from jax.experimental.pallas import tpu as pltpu

_LANE = 128


def _mlp_kernel(x_ref, w1_ref, b1_ref, w2_ref, b2_ref, w3_ref, b3_ref, o_ref):
    # Three matmuls + bias + ReLU fused in VMEM. bf16 inputs on the MXU,
    # f32 accumulation; bias/ReLU in f32, re-cast to bf16 between layers.
    h = jnp.dot(x_ref[...], w1_ref[...], preferred_element_type=jnp.float32)
    h = jnp.maximum(h + b1_ref[...], 0.0).astype(w2_ref.dtype)
    h = jnp.dot(h, w2_ref[...], preferred_element_type=jnp.float32)
    h = jnp.maximum(h + b2_ref[...], 0.0).astype(w3_ref.dtype)
    y = jnp.dot(h, w3_ref[...], preferred_element_type=jnp.float32) + b3_ref[...]
    o_ref[...] = y.astype(o_ref.dtype)


def _round_up(n, m):
    return (n + m - 1) // m * m


def _pad2(a, rows, cols):
    return jnp.pad(a, ((0, rows - a.shape[0]), (0, cols - a.shape[1])))


@functools.partial(jax.jit, static_argnames=("tile_n", "compute_dtype"))
def mlp_forward(x, w1, b1, w2, b2, w3, b3, *, tile_n=256,
                compute_dtype=jnp.bfloat16):
    """x: [N, in_dim] f32 -> [N, out_dim] f32 (bf16 matmul, f32 accumulate)."""
    N, in_dim = x.shape
    hidden = w1.shape[1]
    out_dim = w3.shape[1]
    assert tile_n % 8 == 0, "tile_n must be a multiple of 8 (sublane)"

    # Lane-align every feature dim and tile-align the batch (zero padding is
    # exact for this MLP; padded outputs are sliced away below).
    in_p = _round_up(in_dim, _LANE)
    hid_p = _round_up(hidden, _LANE)
    out_p = _round_up(out_dim, _LANE)
    n_p = _round_up(N, tile_n)

    xp = _pad2(x, n_p, in_p).astype(compute_dtype)
    w1p = _pad2(w1, in_p, hid_p).astype(compute_dtype)
    w2p = _pad2(w2, hid_p, hid_p).astype(compute_dtype)
    w3p = _pad2(w3, hid_p, out_p).astype(compute_dtype)
    b1p = _pad2(b1, 1, hid_p).astype(jnp.float32)
    b2p = _pad2(b2, 1, hid_p).astype(jnp.float32)
    b3p = _pad2(b3, 1, out_p).astype(jnp.float32)

    grid = (n_p // tile_n,)

    itemsize = jnp.dtype(compute_dtype).itemsize
    weight_elems = in_p * hid_p + hid_p * hid_p + hid_p * out_p
    cost = pl.CostEstimate(
        flops=2 * n_p * weight_elems,
        transcendentals=0,
        bytes_accessed=(n_p * in_p * itemsize          # x stream in
                        + weight_elems * itemsize      # resident weights
                        + n_p * out_p * 4),            # f32 output stream out
    )

    y = pl.pallas_call(
        _mlp_kernel,
        out_shape=jax.ShapeDtypeStruct((n_p, out_p), jnp.float32),
        grid_spec=pltpu.PrefetchScalarGridSpec(
            num_scalar_prefetch=0,
            grid=grid,
            in_specs=[
                pl.BlockSpec((tile_n, in_p), lambda i: (i, 0)),   # x tile (streams)
                pl.BlockSpec((in_p, hid_p), lambda i: (0, 0)),    # w1 (resident)
                pl.BlockSpec((1, hid_p), lambda i: (0, 0)),       # b1
                pl.BlockSpec((hid_p, hid_p), lambda i: (0, 0)),   # w2 (resident)
                pl.BlockSpec((1, hid_p), lambda i: (0, 0)),       # b2
                pl.BlockSpec((hid_p, out_p), lambda i: (0, 0)),   # w3 (resident)
                pl.BlockSpec((1, out_p), lambda i: (0, 0)),       # b3
            ],
            out_specs=pl.BlockSpec((tile_n, out_p), lambda i: (i, 0)),
        ),
        compiler_params=pltpu.CompilerParams(
            dimension_semantics=("parallel",),
            vmem_limit_bytes=32 * 1024 * 1024,
        ),
        cost_estimate=cost,
    )(xp, w1p, b1p, w2p, b2p, w3p, b3p)

    return y[:N, :out_dim]


def init_linear(key, in_dim, out_dim):
    """Deterministic init mimicking nn.Linear's uniform(-1/sqrt(fan_in), ...).
    Weight stored as [in_dim, out_dim] (transpose of PyTorch layout)."""
    kw, kb = jax.random.split(key)
    bound = 1.0 / jnp.sqrt(jnp.float32(in_dim))
    w = jax.random.uniform(kw, (in_dim, out_dim), jnp.float32, -bound, bound)
    b = jax.random.uniform(kb, (1, out_dim), jnp.float32, -bound, bound)
    return w, b


if __name__ == "__main__":
    # Small model dims consistent with the module; batch big enough to show
    # the large-tile config (grid length 2, even -> shards on v7x megacore).
    N, in_dim, hidden_dim, out_dim = 512, 32, 64, 16

    key = jax.random.PRNGKey(0)
    kx, k1, k2, k3 = jax.random.split(key, 4)

    x = jax.random.normal(kx, (N, in_dim), jnp.float32)
    w1, b1 = init_linear(k1, in_dim, hidden_dim)
    w2, b2 = init_linear(k2, hidden_dim, hidden_dim)
    w3, b3 = init_linear(k3, hidden_dim, out_dim)

    out = mlp_forward(x, w1, b1, w2, b2, w3, b3, tile_n=256)
    out = jax.block_until_ready(out)
    assert out.shape == (N, out_dim)

    # Reference under the same bf16-input / f32-accumulate policy.
    cd = jnp.bfloat16
    h = jnp.dot(x.astype(cd), w1.astype(cd), preferred_element_type=jnp.float32) + b1
    h = jnp.maximum(h, 0.0).astype(cd)
    h = jnp.dot(h, w2.astype(cd), preferred_element_type=jnp.float32) + b2
    h = jnp.maximum(h, 0.0).astype(cd)
    ref_bf16 = jnp.dot(h, w3.astype(cd), preferred_element_type=jnp.float32) + b3
    assert jnp.allclose(out, ref_bf16, atol=1e-2, rtol=1e-2), \
        float(jnp.max(jnp.abs(out - ref_bf16)))

    # Loose sanity check against full-f32 math (bf16 rounding tolerance).
    ref32 = jnp.maximum(x @ w1 + b1, 0.0)
    ref32 = jnp.maximum(ref32 @ w2 + b2, 0.0)
    ref32 = ref32 @ w3 + b3
    assert jnp.allclose(out, ref32, atol=0.25, rtol=0.1)

    print("KERNEL_OK")
</pallas_src>

<mosaic_0001>
module attributes {stable_mosaic.version = 11 : i64} {
  func.func @_mlp_kernel(%arg0: i32, %arg1: memref<256x128xbf16, #tpu.memory_space<vmem>>, %arg2: memref<128x128xbf16, #tpu.memory_space<vmem>>, %arg3: memref<1x128xf32, #tpu.memory_space<vmem>>, %arg4: memref<128x128xbf16, #tpu.memory_space<vmem>>, %arg5: memref<1x128xf32, #tpu.memory_space<vmem>>, %arg6: memref<128x128xbf16, #tpu.memory_space<vmem>>, %arg7: memref<1x128xf32, #tpu.memory_space<vmem>>, %arg8: memref<256x128xf32, #tpu.memory_space<vmem>>) attributes {dimension_semantics = [#tpu.dimension_semantics<parallel>], iteration_bounds = array<i64: 2>, scalar_prefetch = 0 : i64, scratch_operands = 0 : i64, tpu.core_type = #tpu.core_type<tc>, window_params = [{transform_indices = @transform_0, window_bounds = array<i64: 256, 128>}, {pipeline_mode = #tpu.pipeline_mode<synchronous>, transform_indices = @transform_1, window_bounds = array<i64: 128, 128>}, {pipeline_mode = #tpu.pipeline_mode<synchronous>, transform_indices = @transform_2, window_bounds = array<i64: 1, 128>}, {pipeline_mode = #tpu.pipeline_mode<synchronous>, transform_indices = @transform_3, window_bounds = array<i64: 128, 128>}, {pipeline_mode = #tpu.pipeline_mode<synchronous>, transform_indices = @transform_4, window_bounds = array<i64: 1, 128>}, {pipeline_mode = #tpu.pipeline_mode<synchronous>, transform_indices = @transform_5, window_bounds = array<i64: 128, 128>}, {pipeline_mode = #tpu.pipeline_mode<synchronous>, transform_indices = @transform_6, window_bounds = array<i64: 1, 128>}, {transform_indices = @transform_7, window_bounds = array<i64: 256, 128>}]} {
    %c0 = arith.constant 0 : index
    %c0_0 = arith.constant 0 : index
    %0 = vector.load %arg1[%c0, %c0_0] : memref<256x128xbf16, #tpu.memory_space<vmem>>, vector<256x128xbf16>
    %c0_1 = arith.constant 0 : index
    %c0_2 = arith.constant 0 : index
    %1 = vector.load %arg2[%c0_1, %c0_2] : memref<128x128xbf16, #tpu.memory_space<vmem>>, vector<128x128xbf16>
    %cst = arith.constant dense<0.000000e+00> : vector<256x128xf32>
    %2 = tpu.matmul %0, %1, %cst {dimension_numbers = #tpu.dot_dimension_numbers<[1], [0], [0], [1], [0, 0, 1, 1], [], []>} : vector<256x128xbf16>, vector<128x128xbf16>, vector<256x128xf32> -> vector<256x128xf32>
    %c0_3 = arith.constant 0 : index
    %c0_4 = arith.constant 0 : index
    %3 = vector.load %arg3[%c0_3, %c0_4] : memref<1x128xf32, #tpu.memory_space<vmem>>, vector<1x128xf32>
    %4 = vector.broadcast %3 : vector<1x128xf32> to vector<256x128xf32>
    %5 = arith.addf %2, %4 : vector<256x128xf32>
    %cst_5 = arith.constant 0.000000e+00 : f32
    %6 = vector.broadcast %cst_5 : f32 to vector<256x128xf32>
    %7 = arith.maximumf %5, %6 : vector<256x128xf32>
    %8 = arith.truncf %7 : vector<256x128xf32> to vector<256x128xbf16>
    %c0_6 = arith.constant 0 : index
    %c0_7 = arith.constant 0 : index
    %9 = vector.load %arg4[%c0_6, %c0_7] : memref<128x128xbf16, #tpu.memory_space<vmem>>, vector<128x128xbf16>
    %cst_8 = arith.constant dense<0.000000e+00> : vector<256x128xf32>
    %10 = tpu.matmul %8, %9, %cst_8 {dimension_numbers = #tpu.dot_dimension_numbers<[1], [0], [0], [1], [0, 0, 1, 1], [], []>} : vector<256x128xbf16>, vector<128x128xbf16>, vector<256x128xf32> -> vector<256x128xf32>
    %c0_9 = arith.constant 0 : index
    %c0_10 = arith.constant 0 : index
    %11 = vector.load %arg5[%c0_9, %c0_10] : memref<1x128xf32, #tpu.memory_space<vmem>>, vector<1x128xf32>
    %12 = vector.broadcast %11 : vector<1x128xf32> to vector<256x128xf32>
    %13 = arith.addf %10, %12 : vector<256x128xf32>
    %cst_11 = arith.constant 0.000000e+00 : f32
    %14 = vector.broadcast %cst_11 : f32 to vector<256x128xf32>
    %15 = arith.maximumf %13, %14 : vector<256x128xf32>
    %16 = arith.truncf %15 : vector<256x128xf32> to vector<256x128xbf16>
    %c0_12 = arith.constant 0 : index
    %c0_13 = arith.constant 0 : index
    %17 = vector.load %arg6[%c0_12, %c0_13] : memref<128x128xbf16, #tpu.memory_space<vmem>>, vector<128x128xbf16>
    %cst_14 = arith.constant dense<0.000000e+00> : vector<256x128xf32>
    %18 = tpu.matmul %16, %17, %cst_14 {dimension_numbers = #tpu.dot_dimension_numbers<[1], [0], [0], [1], [0, 0, 1, 1], [], []>} : vector<256x128xbf16>, vector<128x128xbf16>, vector<256x128xf32> -> vector<256x128xf32>
    %c0_15 = arith.constant 0 : index
    %c0_16 = arith.constant 0 : index
    %19 = vector.load %arg7[%c0_15, %c0_16] : memref<1x128xf32, #tpu.memory_space<vmem>>, vector<1x128xf32>
    %20 = vector.broadcast %19 : vector<1x128xf32> to vector<256x128xf32>
    %21 = arith.addf %18, %20 : vector<256x128xf32>
    %c0_17 = arith.constant 0 : index
    %c0_18 = arith.constant 0 : index
    %22 = vector.load %arg8[%c0_17, %c0_18] : memref<256x128xf32, #tpu.memory_space<vmem>>, vector<256x128xf32>
    tpu.vector_store %arg8[%c0_17, %c0_18], %21 {strides = array<i32>} : memref<256x128xf32, #tpu.memory_space<vmem>>, vector<256x128xf32>,
    return
  }
  func.func @transform_0(%arg0: i32) -> (i32, i32) {
    %c0_i32 = arith.constant 0 : i32
    %c0_i32_0 = arith.constant 0 : i32
    return %arg0, %c0_i32 : i32, i32
  }
  func.func @transform_1(%arg0: i32) -> (i32, i32) {
    %c0_i32 = arith.constant 0 : i32
    %c0_i32_0 = arith.constant 0 : i32
    %c0_i32_1 = arith.constant 0 : i32
    return %c0_i32, %c0_i32_0 : i32, i32
  }
  func.func @transform_2(%arg0: i32) -> (i32, i32) {
    %c0_i32 = arith.constant 0 : i32
    %c0_i32_0 = arith.constant 0 : i32
    %c0_i32_1 = arith.constant 0 : i32
    return %c0_i32, %c0_i32_0 : i32, i32
  }
  func.func @transform_3(%arg0: i32) -> (i32, i32) {
    %c0_i32 = arith.constant 0 : i32
    %c0_i32_0 = arith.constant 0 : i32
    %c0_i32_1 = arith.constant 0 : i32
    return %c0_i32, %c0_i32_0 : i32, i32
  }
  func.func @transform_4(%arg0: i32) -> (i32, i32) {
    %c0_i32 = arith.constant 0 : i32
    %c0_i32_0 = arith.constant 0 : i32
    %c0_i32_1 = arith.constant 0 : i32
    return %c0_i32, %c0_i32_0 : i32, i32
  }
  func.func @transform_5(%arg0: i32) -> (i32, i32) {
    %c0_i32 = arith.constant 0 : i32
    %c0_i32_0 = arith.constant 0 : i32
    %c0_i32_1 = arith.constant 0 : i32
    return %c0_i32, %c0_i32_0 : i32, i32
  }
  func.func @transform_6(%arg0: i32) -> (i32, i32) {
    %c0_i32 = arith.constant 0 : i32
    %c0_i32_0 = arith.constant 0 : i32
    %c0_i32_1 = arith.constant 0 : i32
    return %c0_i32, %c0_i32_0 : i32, i32
  }
  func.func @transform_7(%arg0: i32) -> (i32, i32) {
    %c0_i32 = arith.constant 0 : i32
    %c0_i32_0 = arith.constant 0 : i32
    return %arg0, %c0_i32 : i32, i32
  }
}

</mosaic_0001>

<llo_original>
// kernel: mlp_forward.1
$region0: #{mlp_forward.1}
  #allocation0 [shape = 'u32[]', space=smem, size = 0x4, offset = 0x4, fixed_abs, tag = 'smem constant byte address 0x4 - core index']
  #allocation1 [shape = 'u32[144,128]{1,0:T(1,128)}', space=vmem, size = 0x12000, scoped, tag = 'internal scratch']
  %s0 = inlined_call_operand.vmem [shape: bf16[512,128], index: 0, kind: input, shape index: {}]
  %s1 = inlined_call_operand.vmem [shape: bf16[128,128], index: 1, kind: input, shape index: {}]
  %s2 = inlined_call_operand.vmem [shape: f32[1,128], index: 2, kind: input, shape index: {}]
  %s3 = inlined_call_operand.vmem [shape: bf16[128,128], index: 3, kind: input, shape index: {}]
  %s4 = inlined_call_operand.vmem [shape: f32[1,128], index: 4, kind: input, shape index: {}]
  %s5 = inlined_call_operand.vmem [shape: bf16[128,128], index: 5, kind: input, shape index: {}]
  %s6 = inlined_call_operand.vmem [shape: f32[1,128], index: 6, kind: input, shape index: {}]
  %s7 = inlined_call_operand.vmem [shape: f32[512,128], index: 7, kind: output, shape index: {}]
  %s8 = sld [smem:[#allocation0]]
  $region61: #{mlp_forward.1} parent=0
    _
  %s10 = ssub.s32 1, %s8
  %s11 = scalar_select 0, %s10, %s8
  loop: start=0, step=1, limit=4
  $region2: #{mlp_forward.1} parent=0 // loop_pre_header
    _
  $region3: #{mlp_forward.1} parent=0 // loop_header
    %s13 = sphi 0, %s17
    %p14 = scmp.ge.s32.totalorder %s13, 4
    %s23 = sphi 0, %s25
    %s26 = sphi 0, %s23
    %s27 = sphi 0, %s26
    %s43 = sphi 0, %s27
    %s47 = sphi 0, %s47
    %s49 = sphi 0, %s47
    %s50 = sphi 0, %s49
    %s64 = sphi 0, %s50
    %s68 = sphi 0, %s68
    %s70 = sphi 0, %s68
    %s71 = sphi 0, %s70
    %s85 = sphi 0, %s71
    %s89 = sphi 0, %s89
    %s91 = sphi 0, %s89
    %s92 = sphi 0, %s91
    %s106 = sphi 0, %s92
    %s110 = sphi 0, %s110
    %s112 = sphi 0, %s110
    %s113 = sphi 0, %s112
    %s127 = sphi 0, %s113
    %s131 = sphi 0, %s131
    %s133 = sphi 0, %s131
    %s134 = sphi 0, %s133
    %s148 = sphi 0, %s134
    %s152 = sphi 0, %s152
    %s154 = sphi 0, %s152
    %s155 = sphi 0, %s154
    %s169 = sphi 0, %s155
    %s175 = sphi 0, %s177
    %s178 = sphi 0, %s175
    %s179 = sphi 0, %s178
    %s195 = sphi 0, %s179
  $region4: #{mlp_forward.1} parent=0 // loop_header_branch
    %16 = sbr.rel (%p14) target = $region8
  $region5: #{mlp_forward.1} parent=0 // loop_body
    %s18 = ssub.s32 %s13, 1
    %s19 = ssub.s32 %s13, 2
    %s20 = sadd.s32 %s13, 1
    %s21 = ssub.s32 %s13, %s20
    %p22 = scmp.eq.s32.totalorder %s21, 0
    %s24 = sadd.s32 %s23, 1
    %s25 = scalar_select %p22, %s23, %s24
    %p28 = pneg %p22
    %p29 = scmp.eq.s32.totalorder %s13, 1
    %p30 = por %p28, %p29
    %p31 = scmp.ne.s32.totalorder %s23, %s26
    %p32 = scmp.eq.s32.totalorder %s13, 0
    %p33 = por %p31, %p32
    %p34 = scmp.ne.s32.totalorder %s23, %s26
    %p35 = scmp.eq.s32.totalorder %s18, 1
    %p36 = por %p34, %p35
    %p37 = scmp.ne.s32.totalorder %s26, %s27
    %p38 = scmp.eq.s32.totalorder %s18, 0
    %p39 = por %p37, %p38
    %p40 = scmp.ne.s32.totalorder %s26, %s27
    %p41 = scmp.eq.s32.totalorder %s19, 1
    %p42 = por %p40, %p41
    %p44 = scmp.ne.s32.totalorder %s27, %s43
    %p45 = scmp.eq.s32.totalorder %s19, 0
    %p46 = por %p44, %p45
    %s48 = sadd.s32 %s47, 1
    %p51 = scmp.eq.s32.totalorder %s13, 1
    %p52 = scmp.ne.s32.totalorder %s47, %s49
    %p53 = scmp.eq.s32.totalorder %s13, 0
    %p54 = por %p52, %p53
    %p55 = scmp.ne.s32.totalorder %s47, %s49
    %p56 = scmp.eq.s32.totalorder %s18, 1
    %p57 = por %p55, %p56
    %p58 = scmp.ne.s32.totalorder %s49, %s50
    %p59 = scmp.eq.s32.totalorder %s18, 0
    %p60 = por %p58, %p59
    %p61 = scmp.ne.s32.totalorder %s49, %s50
    %p62 = scmp.eq.s32.totalorder %s19, 1
    %p63 = por %p61, %p62
    %p65 = scmp.ne.s32.totalorder %s50, %s64
    %p66 = scmp.eq.s32.totalorder %s19, 0
    %p67 = por %p65, %p66
    %s69 = sadd.s32 %s68, 1
    %p72 = scmp.eq.s32.totalorder %s13, 1
    %p73 = scmp.ne.s32.totalorder %s68, %s70
    %p74 = scmp.eq.s32.totalorder %s13, 0
    %p75 = por %p73, %p74
    %p76 = scmp.ne.s32.totalorder %s68, %s70
    %p77 = scmp.eq.s32.totalorder %s18, 1
    %p78 = por %p76, %p77
    %p79 = scmp.ne.s32.totalorder %s70, %s71
    %p80 = scmp.eq.s32.totalorder %s18, 0
    %p81 = por %p79, %p80
    %p82 = scmp.ne.s32.totalorder %s70, %s71
    %p83 = scmp.eq.s32.totalorder %s19, 1
    %p84 = por %p82, %p83
    %p86 = scmp.ne.s32.totalorder %s71, %s85
    %p87 = scmp.eq.s32.totalorder %s19, 0
    %p88 = por %p86, %p87
    %s90 = sadd.s32 %s89, 1
    %p93 = scmp.eq.s32.totalorder %s13, 1
    %p94 = scmp.ne.s32.totalorder %s89, %s91
    %p95 = scmp.eq.s32.totalorder %s13, 0
    %p96 = por %p94, %p95
    %p97 = scmp.ne.s32.totalorder %s89, %s91
    %p98 = scmp.eq.s32.totalorder %s18, 1
    %p99 = por %p97, %p98
    %p100 = scmp.ne.s32.totalorder %s91, %s92
    %p101 = scmp.eq.s32.totalorder %s18, 0
    %p102 = por %p100, %p101
    %p103 = scmp.ne.s32.totalorder %s91, %s92
    %p104 = scmp.eq.s32.totalorder %s19, 1
    %p105 = por %p103, %p104
    %p107 = scmp.ne.s32.totalorder %s92, %s106
    %p108 = scmp.eq.s32.totalorder %s19, 0
    %p109 = por %p107, %p108
    %s111 = sadd.s32 %s110, 1
    %p114 = scmp.eq.s32.totalorder %s13, 1
    %p115 = scmp.ne.s32.totalorder %s110, %s112
    %p116 = scmp.eq.s32.totalorder %s13, 0
    %p117 = por %p115, %p116
    %p118 = scmp.ne.s32.totalorder %s110, %s112
    %p119 = scmp.eq.s32.totalorder %s18, 1
    %p120 = por %p118, %p119
    %p121 = scmp.ne.s32.totalorder %s112, %s113
    %p122 = scmp.eq.s32.totalorder %s18, 0
    %p123 = por %p121, %p122
    %p124 = scmp.ne.s32.totalorder %s112, %s113
    %p125 = scmp.eq.s32.totalorder %s19, 1
    %p126 = por %p124, %p125
    %p128 = scmp.ne.s32.totalorder %s113, %s127
    %p129 = scmp.eq.s32.totalorder %s19, 0
    %p130 = por %p128, %p129
    %s132 = sadd.s32 %s131, 1
    %p135 = scmp.eq.s32.totalorder %s13, 1
    %p136 = scmp.ne.s32.totalorder %s131, %s133
    %p137 = scmp.eq.s32.totalorder %s13, 0
    %p138 = por %p136, %p137
    %p139 = scmp.ne.s32.totalorder %s131, %s133
    %p140 = scmp.eq.s32.totalorder %s18, 1
    %p141 = por %p139, %p140
    %p142 = scmp.ne.s32.totalorder %s133, %s134
    %p143 = scmp.eq.s32.totalorder %s18, 0
    %p144 = por %p142, %p143
    %p145 = scmp.ne.s32.totalorder %s133, %s134
    %p146 = scmp.eq.s32.totalorder %s19, 1
    %p147 = por %p145, %p146
    %p149 = scmp.ne.s32.totalorder %s134, %s148
    %p150 = scmp.eq.s32.totalorder %s19, 0
    %p151 = por %p149, %p150
    %s153 = sadd.s32 %s152, 1
    %p156 = scmp.eq.s32.totalorder %s13, 1
    %p157 = scmp.ne.s32.totalorder %s152, %s154
    %p158 = scmp.eq.s32.totalorder %s13, 0
    %p159 = por %p157, %p158
    %p160 = scmp.ne.s32.totalorder %s152, %s154
    %p161 = scmp.eq.s32.totalorder %s18, 1
    %p162 = por %p160, %p161
    %p163 = scmp.ne.s32.totalorder %s154, %s155
    %p164 = scmp.eq.s32.totalorder %s18, 0
    %p165 = por %p163, %p164
    %p166 = scmp.ne.s32.totalorder %s154, %s155
    %p167 = scmp.eq.s32.totalorder %s19, 1
    %p168 = por %p166, %p167
    %p170 = scmp.ne.s32.totalorder %s155, %s169
    %p171 = scmp.eq.s32.totalorder %s19, 0
    %p172 = por %p170, %p171
    %s173 = ssub.s32 %s13, %s20
    %p174 = scmp.eq.s32.totalorder %s173, 0
    %s176 = sadd.s32 %s175, 1
    %s177 = scalar_select %p174, %s175, %s176
    %p180 = pneg %p174
    %p181 = scmp.eq.s32.totalorder %s13, 1
    %p182 = por %p180, %p181
    %p183 = scmp.ne.s32.totalorder %s175, %s178
    %p184 = scmp.eq.s32.totalorder %s13, 0
    %p185 = por %p183, %p184
    %p186 = scmp.ne.s32.totalorder %s175, %s178
    %p187 = scmp.eq.s32.totalorder %s18, 1
    %p188 = por %p186, %p187
    %p189 = scmp.ne.s32.totalorder %s178, %s179
    %p190 = scmp.eq.s32.totalorder %s18, 0
    %p191 = por %p189, %p190
    %p192 = scmp.ne.s32.totalorder %s178, %s179
    %p193 = scmp.eq.s32.totalorder %s19, 1
    %p194 = por %p192, %p193
    %p196 = scmp.ne.s32.totalorder %s179, %s195
    %p197 = scmp.eq.s32.totalorder %s19, 0
    %p198 = por %p196, %p197
    %p199 = scmp.le.s32.totalorder 1, %s13
    %p200 = scmp.lt.s32.totalorder %s13, 3
    %p201 = pnand %p199, %p200
    %p202 = pneg %p201
    // Predicated region
    $region9: #{mlp_forward.1} parent=5 // pred_check
      _
    $region10: #{mlp_forward.1} parent=5 // pred_check_branch
      %204 = sbr.rel (%p201) target = $region12
    $region11: #{mlp_forward.1} parent=5 // pred_region
      %s205 = ssub.s32 %s13, 1
      // Predicated region
      $region13: #{mlp_forward.1} parent=11 // pred_check
        %p206 = pneg %p60
      $region14: #{mlp_forward.1} parent=11 // pred_check_branch
        %208 = sbr.rel (%p206) target = $region16
      $region15: #{mlp_forward.1} parent=11 // pred_region
        _
      $region16: #{mlp_forward.1} parent=11 // pred_fallthru
        _
      // Predicated region
      $region17: #{mlp_forward.1} parent=11 // pred_check
        %p209 = pneg %p81
      $region18: #{mlp_forward.1} parent=11 // pred_check_branch
        %211 = sbr.rel (%p209) target = $region20
      $region19: #{mlp_forward.1} parent=11 // pred_region
        _
      $region20: #{mlp_forward.1} parent=11 // pred_fallthru
        _
      // Predicated region
      $region21: #{mlp_forward.1} parent=11 // pred_check
        %p212 = pneg %p102
      $region22: #{mlp_forward.1} parent=11 // pred_check_branch
        %214 = sbr.rel (%p212) target = $region24
      $region23: #{mlp_forward.1} parent=11 // pred_region
        _
      $region24: #{mlp_forward.1} parent=11 // pred_fallthru
        _
      // Predicated region
      $region25: #{mlp_forward.1} parent=11 // pred_check
        %p215 = pneg %p123
      $region26: #{mlp_forward.1} parent=11 // pred_check_branch
        %217 = sbr.rel (%p215) target = $region28
      $region27: #{mlp_forward.1} parent=11 // pred_region
        _
      $region28: #{mlp_forward.1} parent=11 // pred_fallthru
        _
      // Predicated region
      $region29: #{mlp_forward.1} parent=11 // pred_check
        %p218 = pneg %p144
      $region30: #{mlp_forward.1} parent=11 // pred_check_branch
        %220 = sbr.rel (%p218) target = $region32
      $region31: #{mlp_forward.1} parent=11 // pred_region
        _
      $region32: #{mlp_forward.1} parent=11 // pred_fallthru
        _
      // Predicated region
      $region33: #{mlp_forward.1} parent=11 // pred_check
        %p221 = pneg %p165
      $region34: #{mlp_forward.1} parent=11 // pred_check_branch
        %223 = sbr.rel (%p221) target = $region36
      $region35: #{mlp_forward.1} parent=11 // pred_region
        _
      $region36: #{mlp_forward.1} parent=11 // pred_fallthru
        _
    $region12: #{mlp_forward.1} parent=5 // pred_fallthru
      _
    %p224 = scmp.lt.s32.totalorder %s13, 2
    // Predicated region
    $region37: #{mlp_forward.1} parent=5 // pred_check
      %p225 = pneg %p224
    $region38: #{mlp_forward.1} parent=5 // pred_check_branch
      %227 = sbr.rel (%p225) target = $region40
    $region39: #{mlp_forward.1} parent=5 // pred_region
      // Predicated region
      $region41: #{mlp_forward.1} parent=39 // pred_check
        %p228 = pneg %p33
      $region42: #{mlp_forward.1} parent=39 // pred_check_branch
        %230 = sbr.rel (%p228) target = $region44
      $region43: #{mlp_forward.1} parent=39 // pred_region
        %s231 = smul.u32 32, %s13
        %p232 = scmp.lt.s32.totalorder %s231, 63
        %s233 = scalar_select %p232, %s231, 63
        %s234 = smul.addr %s233, 4
        %s235 = scalar_lea.vmem %s0, %s234
        %s236 = smul.u32 32, %s13
      $region44: #{mlp_forward.1} parent=39 // pred_fallthru
        _
    $region40: #{mlp_forward.1} parent=5 // pred_fallthru
      _
    %p237 = scmp.le.s32.totalorder 1, %s13
    %p238 = scmp.lt.s32.totalorder %s13, 3
    %p239 = pnand %p237, %p238
    %p240 = pneg %p239
    // Predicated region
    $region45: #{mlp_forward.1} parent=5 // pred_check
      _
    $region46: #{mlp_forward.1} parent=5 // pred_check_branch
      %242 = sbr.rel (%p239) target = $region48
    $region47: #{mlp_forward.1} parent=5 // pred_region
      %s243 = ssub.s32 %s13, 1
      %s244 = smul.u32 32, %s18
      %p245 = scmp.lt.s32.totalorder %s244, 63
      %s246 = scalar_select %p245, %s244, 63
      %s247 = smul.addr %s246, 4
      %s248 = scalar_lea.vmem %s0, %s247
      %p249 = pneg %p39
      %p250 = pneg %p36
      %p251 = pneg %p60
      %p252 = pneg %p57
      %p253 = pneg %p81
      %p254 = pneg %p78
      %p255 = pneg %p102
      %p256 = pneg %p99
      %p257 = pneg %p123
      %p258 = pneg %p120
      %p259 = pneg %p144
      %p260 = pneg %p141
      %p261 = pneg %p165
      %p262 = pneg %p162
      %p263 = pneg %p191
      %p264 = pneg %p188
      %s265 = smul.u32 32, %s18
      %p266 = scmp.lt.s32.totalorder %s265, 63
      %s267 = scalar_select %p266, %s265, 63
      %s268 = smul.addr %s267, 8
      %s269 = scalar_lea.vmem %s7, %s268
      %s270 = smul.u32 32, %s18
      %p271 = scmp.lt.s32.totalorder %s270, 63
      %s272 = scalar_select %p271, %s270, 63
      %s273 = smul.addr %s272, 4
      %s274 = scalar_lea.vmem %s0, %s273
      %s275 = smul.u32 32, %s18
      %s276 = smul.u32 32, %s18
      %p277 = scmp.lt.s32.totalorder %s276, 63
      %s278 = scalar_select %p277, %s276, 63
      %s279 = smul.addr %s278, 8
      %s280 = scalar_lea.vmem %s7, %s279
      %s281 = smul.u32 32, %s18
      %v283 = vld [vmem:[%s274] sm:$0xf]
      %v284 = vld [vmem:[%s274 + $0x4] sm:$0xf]
      %v285 = vld [vmem:[%s274 + $0x8] sm:$0xf]
      %v286 = vld [vmem:[%s274 + $0xc] sm:$0xf]
      %v287 = vld [vmem:[%s274 + $0x10] sm:$0xf]
      %v288 = vld [vmem:[%s274 + $0x14] sm:$0xf]
      %v289 = vld [vmem:[%s274 + $0x18] sm:$0xf]
      %v290 = vld [vmem:[%s274 + $0x1c] sm:$0xf]
      %v291 = vld [vmem:[%s274 + $0x20] sm:$0xf]
      %v292 = vld [vmem:[%s274 + $0x24] sm:$0xf]
      %v293 = vld [vmem:[%s274 + $0x28] sm:$0xf]
      %v294 = vld [vmem:[%s274 + $0x2c] sm:$0xf]
      %v295 = vld [vmem:[%s274 + $0x30] sm:$0xf]
      %v296 = vld [vmem:[%s274 + $0x34] sm:$0xf]
      %v297 = vld [vmem:[%s274 + $0x38] sm:$0xf]
      %v298 = vld [vmem:[%s274 + $0x3c] sm:$0xf]
      %v299 = vld [vmem:[%s274 + $0x40] sm:$0xf]
      %v300 = vld [vmem:[%s274 + $0x44] sm:$0xf]
      %v301 = vld [vmem:[%s274 + $0x48] sm:$0xf]
      %v302 = vld [vmem:[%s274 + $0x4c] sm:$0xf]
      %v303 = vld [vmem:[%s274 + $0x50] sm:$0xf]
      %v304 = vld [vmem:[%s274 + $0x54] sm:$0xf]
      %v305 = vld [vmem:[%s274 + $0x58] sm:$0xf]
      %v306 = vld [vmem:[%s274 + $0x5c] sm:$0xf]
      %v307 = vld [vmem:[%s274 + $0x60] sm:$0xf]
      %v308 = vld [vmem:[%s274 + $0x64] sm:$0xf]
      %v309 = vld [vmem:[%s274 + $0x68] sm:$0xf]
      %v310 = vld [vmem:[%s274 + $0x6c] sm:$0xf]
      %v311 = vld [vmem:[%s274 + $0x70] sm:$0xf]
      %v312 = vld [vmem:[%s274 + $0x74] sm:$0xf]
      %v313 = vld [vmem:[%s274 + $0x78] sm:$0xf]
      %v314 = vld [vmem:[%s274 + $0x7c] sm:$0xf]
      %v315 = vld [vmem:[%s1] sm:$0xf]
      %v316 = vld [vmem:[%s1 + $0x4] sm:$0xf]
      %v317 = vld [vmem:[%s1 + $0x8] sm:$0xf]
      %v318 = vld [vmem:[%s1 + $0xc] sm:$0xf]
      %v319 = vld [vmem:[%s1 + $0x10] sm:$0xf]
      %v320 = vld [vmem:[%s1 + $0x14] sm:$0xf]
      %v321 = vld [vmem:[%s1 + $0x18] sm:$0xf]
      %v322 = vld [vmem:[%s1 + $0x1c] sm:$0xf]
      %v323 = vld [vmem:[%s1 + $0x20] sm:$0xf]
      %v324 = vld [vmem:[%s1 + $0x24] sm:$0xf]
      %v325 = vld [vmem:[%s1 + $0x28] sm:$0xf]
      %v326 = vld [vmem:[%s1 + $0x2c] sm:$0xf]
      %v327 = vld [vmem:[%s1 + $0x30] sm:$0xf]
      %v328 = vld [vmem:[%s1 + $0x34] sm:$0xf]
      %v329 = vld [vmem:[%s1 + $0x38] sm:$0xf]
      %v330 = vld [vmem:[%s1 + $0x3c] sm:$0xf]
      %v331 = vld [vmem:[%s2] sm:$0x1]
      %v333 = vlaneseq
      %v334 = vshrl.u32 %v333, 7
      %v335 = vsub.s32 0, %v334
      %v336 = vrot.slane %v331, %v335
      %v370 = vunpack.c.l.b16 %v283
      %v371 = vunpack.c.l.b16 %v284
      %v372 = vunpack.c.l.b16 %v285
      %v373 = vunpack.c.l.b16 %v286
      %v374 = vunpack.c.l.b16 %v287
      %v375 = vunpack.c.l.b16 %v288
      %v376 = vunpack.c.l.b16 %v289
      %v377 = vunpack.c.l.b16 %v290
      %v378 = vunpack.c.l.b16 %v291
      %v379 = vunpack.c.l.b16 %v292
      %v380 = vunpack.c.l.b16 %v293
      %v381 = vunpack.c.l.b16 %v294
      %v382 = vunpack.c.l.b16 %v295
      %v383 = vunpack.c.l.b16 %v296
      %v384 = vunpack.c.l.b16 %v297
      %v385 = vunpack.c.l.b16 %v298
      %v386 = vunpack.c.l.b16 %v299
      %v387 = vunpack.c.l.b16 %v300
      %v388 = vunpack.c.l.b16 %v301
      %v389 = vunpack.c.l.b16 %v302
      %v390 = vunpack.c.l.b16 %v303
      %v391 = vunpack.c.l.b16 %v304
      %v392 = vunpack.c.l.b16 %v305
      %v393 = vunpack.c.l.b16 %v306
      %v394 = vunpack.c.l.b16 %v307
      %v395 = vunpack.c.l.b16 %v308
      %v396 = vunpack.c.l.b16 %v309
      %v397 = vunpack.c.l.b16 %v310
      %v398 = vunpack.c.l.b16 %v311
      %v399 = vunpack.c.l.b16 %v312
      %v400 = vunpack.c.l.b16 %v313
      %v401 = vunpack.c.l.b16 %v314
      %v402 = vpack.c.b16 %v371, %v370
      %v403 = vpack.c.b16 %v373, %v372
      %v404 = vpack.c.b16 %v375, %v374
      %v405 = vpack.c.b16 %v377, %v376
      %v406 = vpack.c.b16 %v379, %v378
      %v407 = vpack.c.b16 %v381, %v380
      %v408 = vpack.c.b16 %v383, %v382
      %v409 = vpack.c.b16 %v385, %v384
      %v410 = vpack.c.b16 %v387, %v386
      %v411 = vpack.c.b16 %v389, %v388
      %v412 = vpack.c.b16 %v391, %v390
      %v413 = vpack.c.b16 %v393, %v392
      %v414 = vpack.c.b16 %v395, %v394
      %v415 = vpack.c.b16 %v397, %v396
      %v416 = vpack.c.b16 %v399, %v398
      %v417 = vpack.c.b16 %v401, %v400
      %v450 = vunpack.c.l.b16 %v315
      %v451 = vunpack.c.l.b16 %v316
      %v452 = vunpack.c.l.b16 %v317
      %v453 = vunpack.c.l.b16 %v318
      %v454 = vunpack.c.l.b16 %v319
      %v455 = vunpack.c.l.b16 %v320
      %v456 = vunpack.c.l.b16 %v321
      %v457 = vunpack.c.l.b16 %v322
      %v458 = vunpack.c.l.b16 %v323
      %v459 = vunpack.c.l.b16 %v324
      %v460 = vunpack.c.l.b16 %v325
      %v461 = vunpack.c.l.b16 %v326
      %v462 = vunpack.c.l.b16 %v327
      %v463 = vunpack.c.l.b16 %v328
      %v464 = vunpack.c.l.b16 %v329
      %v465 = vunpack.c.l.b16 %v330
      %v466 = vpack.c.b16 %v451, %v450
      %v467 = vpack.c.b16 %v453, %v452
      %v468 = vpack.c.b16 %v455, %v454
      %v469 = vpack.c.b16 %v457, %v456
      %v470 = vpack.c.b16 %v459, %v458
      %v471 = vpack.c.b16 %v461, %v460
      %v472 = vpack.c.b16 %v463, %v462
      %v473 = vpack.c.b16 %v465, %v464
      %482 = vmatprep.subr.bf16.mxu0 0
      %483 = vmatpush1.bf16.msra.mxu0 %v466
      %484 = vmatprep.subr.bf16.mxu0 0
      %485 = vmatpush1.bf16.msra.mxu0 %v467
      %486 = vmatprep.subr.bf16.mxu0 0
      %487 = vmatpush1.bf16.msra.mxu0 %v468
      %488 = vmatprep.subr.bf16.mxu0 0
      %489 = vmatpush1.bf16.msra.mxu0 %v469
      %490 = vmatprep.subr.bf16.mxu0 0
      %491 = vmatpush1.bf16.msra.mxu0 %v470
      %492 = vmatprep.subr.bf16.mxu0 0
      %493 = vmatpush1.bf16.msra.mxu0 %v471
      %494 = vmatprep.subr.bf16.mxu0 0
      %495 = vmatpush1.bf16.msra.mxu0 %v472
      %496 = vmatprep.subr.bf16.mxu0 0
      %497 = vmatpush1.bf16.msra.mxu0 %v473
      %498 = vmatprep.subr.bf16.mxu0 0
      %499 = vmatpush1.bf16.msra.mxu0 0
      %500 = vmatprep.subr.bf16.mxu0 0
      %501 = vmatpush1.bf16.msra.mxu0 0
      %502 = vmatprep.subr.bf16.mxu0 0
      %503 = vmatpush1.bf16.msra.mxu0 0
      %504 = vmatprep.subr.bf16.mxu0 0
      %505 = vmatpush1.bf16.msra.mxu0 0
      %506 = vmatprep.subr.bf16.mxu0 0
      %507 = vmatpush1.bf16.msra.mxu0 0
      %508 = vmatprep.subr.bf16.mxu0 0
      %509 = vmatpush1.bf16.msra.mxu0 0
      %510 = vmatprep.subr.bf16.mxu0 0
      %511 = vmatpush1.bf16.msra.mxu0 0
      %512 = vmatprep.subr.bf16.mxu0 0
      %513 = vmatpush1.bf16.msra.mxu0 0
      %514 = vmatprep.mubr.bf16.mxu0 0
      %515 = vmatmul.mubr.bf16.gmra.mrb[0].mxu0 %v402
      %v516 = vpop.f32.mrb[0].mxu0
      %v517 = vadd.f32 %v336, %v516
      %v518 = vpop.f32.mrb[0].mxu0
      %v519 = vpop.f32.mrb[0].mxu0
      %v520 = vadd.f32 %v336, %v519
      %v521 = vpop.f32.mrb[0].mxu0
      %522 = vmatprep.mubr.bf16.mxu0 0
      %523 = vmatmul.mubr.bf16.gmra.mrb[0].mxu0 %v403
      %v524 = vpop.f32.mrb[0].mxu0
      %v525 = vadd.f32 %v336, %v524
      %v526 = vpop.f32.mrb[0].mxu0
      %v527 = vpop.f32.mrb[0].mxu0
      %v528 = vadd.f32 %v336, %v527
      %v529 = vpop.f32.mrb[0].mxu0
      %530 = vmatprep.mubr.bf16.mxu0 0
      %531 = vmatmul.mubr.bf16.gmra.mrb[0].mxu0 %v404
      %v532 = vpop.f32.mrb[0].mxu0
      %v533 = vadd.f32 %v336, %v532
      %v534 = vpop.f32.mrb[0].mxu0
      %v535 = vpop.f32.mrb[0].mxu0
      %v536 = vadd.f32 %v336, %v535
      %v537 = vpop.f32.mrb[0].mxu0
      %538 = vmatprep.mubr.bf16.mxu0 0
      %539 = vmatmul.mubr.bf16.gmra.mrb[0].mxu0 %v405
      %v540 = vpop.f32.mrb[0].mxu0
      %v541 = vadd.f32 %v336, %v540
      %v542 = vpop.f32.mrb[0].mxu0
      %v543 = vpop.f32.mrb[0].mxu0
      %v544 = vadd.f32 %v336, %v543
      %v545 = vpop.f32.mrb[0].mxu0
      %546 = vmatprep.mubr.bf16.mxu0 0
      %547 = vmatmul.mubr.bf16.gmra.mrb[0].mxu0 %v406
      %v548 = vpop.f32.mrb[0].mxu0
      %v549 = vadd.f32 %v336, %v548
      %v550 = vpop.f32.mrb[0].mxu0
      %v551 = vpop.f32.mrb[0].mxu0
      %v552 = vadd.f32 %v336, %v551
      %v553 = vpop.f32.mrb[0].mxu0
      %554 = vmatprep.mubr.bf16.mxu0 0
      %555 = vmatmul.mubr.bf16.gmra.mrb[0].mxu0 %v407
      %v556 = vpop.f32.mrb[0].mxu0
      %v557 = vadd.f32 %v336, %v556
      %v558 = vpop.f32.mrb[0].mxu0
      %v559 = vpop.f32.mrb[0].mxu0
      %v560 = vadd.f32 %v336, %v559
      %v561 = vpop.f32.mrb[0].mxu0
      %562 = vmatprep.mubr.bf16.mxu0 0
      %563 = vmatmul.mubr.bf16.gmra.mrb[0].mxu0 %v408
      %v564 = vpop.f32.mrb[0].mxu0
      %v565 = vadd.f32 %v336, %v564
      %v566 = vpop.f32.mrb[0].mxu0
      %v567 = vpop.f32.mrb[0].mxu0
      %v568 = vadd.f32 %v336, %v567
      %v569 = vpop.f32.mrb[0].mxu0
      %570 = vmatprep.mubr.bf16.mxu0 0
      %571 = vmatmul.mubr.bf16.gmra.mrb[0].mxu0 %v409
      %v572 = vpop.f32.mrb[0].mxu0
      %v573 = vadd.f32 %v336, %v572
      %v574 = vpop.f32.mrb[0].mxu0
      %v575 = vpop.f32.mrb[0].mxu0
      %v576 = vadd.f32 %v336, %v575
      %v577 = vpop.f32.mrb[0].mxu0
      %578 = vmatprep.mubr.bf16.mxu0 0
      %579 = vmatmul.mubr.bf16.gmra.mrb[0].mxu0 %v410
      %v580 = vpop.f32.mrb[0].mxu0
      %v581 = vadd.f32 %v336, %v580
      %v582 = vpop.f32.mrb[0].mxu0
      %v583 = vpop.f32.mrb[0].mxu0
      %v584 = vadd.f32 %v336, %v583
      %v585 = vpop.f32.mrb[0].mxu0
      %586 = vmatprep.mubr.bf16.mxu0 0
      %587 = vmatmul.mubr.bf16.gmra.mrb[0].mxu0 %v411
      %v588 = vpop.f32.mrb[0].mxu0
      %v589 = vadd.f32 %v336, %v588
      %v590 = vpop.f32.mrb[0].mxu0
      %v591 = vpop.f32.mrb[0].mxu0
      %v592 = vadd.f32 %v336, %v591
      %v593 = vpop.f32.mrb[0].mxu0
      %594 = vmatprep.mubr.bf16.mxu0 0
      %595 = vmatmul.mubr.bf16.gmra.mrb[0].mxu0 %v412
      %v596 = vpop.f32.mrb[0].mxu0
      %v597 = vadd.f32 %v336, %v596
      %v598 = vpop.f32.mrb[0].mxu0
      %v599 = vpop.f32.mrb[0].mxu0
      %v600 = vadd.f32 %v336, %v599
      %v601 = vpop.f32.mrb[0].mxu0
      %602 = vmatprep.mubr.bf16.mxu0 0
      %603 = vmatmul.mubr.bf16.gmra.mrb[0].mxu0 %v413
      %v604 = vpop.f32.mrb[0].mxu0
      %v605 = vadd.f32 %v336, %v604
      %v606 = vpop.f32.mrb[0].mxu0
      %v607 = vpop.f32.mrb[0].mxu0
      %v608 = vadd.f32 %v336, %v607
      %v609 = vpop.f32.mrb[0].mxu0
      %610 = vmatprep.mubr.bf16.mxu0 0
      %611 = vmatmul.mubr.bf16.gmra.mrb[0].mxu0 %v414
      %v612 = vpop.f32.mrb[0].mxu0
      %v613 = vadd.f32 %v336, %v612
      %v614 = vpop.f32.mrb[0].mxu0
      %v615 = vpop.f32.mrb[0].mxu0
      %v616 = vadd.f32 %v336, %v615
      %v617 = vpop.f32.mrb[0].mxu0
      %618 = vmatprep.mubr.bf16.mxu0 0
      %619 = vmatmul.mubr.bf16.gmra.mrb[0].mxu0 %v415
      %v620 = vpop.f32.mrb[0].mxu0
      %v621 = vadd.f32 %v336, %v620
      %v622 = vpop.f32.mrb[0].mxu0
      %v623 = vpop.f32.mrb[0].mxu0
      %v624 = vadd.f32 %v336, %v623
      %v625 = vpop.f32.mrb[0].mxu0
      %626 = vmatprep.mubr.bf16.mxu0 0
      %627 = vmatmul.mubr.bf16.gmra.mrb[0].mxu0 %v416
      %v628 = vpop.f32.mrb[0].mxu0
      %v629 = vadd.f32 %v336, %v628
      %v630 = vpop.f32.mrb[0].mxu0
      %v631 = vpop.f32.mrb[0].mxu0
      %v632 = vadd.f32 %v336, %v631
      %v633 = vpop.f32.mrb[0].mxu0
      %634 = vmatprep.mubr.bf16.mxu0 0
      %635 = vmatmul.mubr.bf16.gmra.mrb[0].mxu0 %v417
      %v636 = vpop.f32.mrb[0].mxu0
      %v637 = vadd.f32 %v336, %v636
      %v638 = vpop.f32.mrb[0].mxu0
      %v639 = vpop.f32.mrb[0].mxu0
      %v640 = vadd.f32 %v336, %v639
      %v641 = vpop.f32.mrb[0].mxu0
      %642 = vdwg.mxu0
      %v643 = vmax.f32 %v517, 0.0
      %v644 = vmax.f32 %v520, 0.0
      %v645 = vmax.f32 %v525, 0.0
      %v646 = vmax.f32 %v528, 0.0
      %v647 = vmax.f32 %v533, 0.0
      %v648 = vmax.f32 %v536, 0.0
      %v649 = vmax.f32 %v541, 0.0
      %v650 = vmax.f32 %v544, 0.0
      %v651 = vmax.f32 %v549, 0.0
      %v652 = vmax.f32 %v552, 0.0
      %v653 = vmax.f32 %v557, 0.0
      %v654 = vmax.f32 %v560, 0.0
      %v655 = vmax.f32 %v565, 0.0
      %v656 = vmax.f32 %v568, 0.0
      %v657 = vmax.f32 %v573, 0.0
      %v658 = vmax.f32 %v576, 0.0
      %v659 = vmax.f32 %v581, 0.0
      %v660 = vmax.f32 %v584, 0.0
      %v661 = vmax.f32 %v589, 0.0
      %v662 = vmax.f32 %v592, 0.0
      %v663 = vmax.f32 %v597, 0.0
      %v664 = vmax.f32 %v600, 0.0
      %v665 = vmax.f32 %v605, 0.0
      %v666 = vmax.f32 %v608, 0.0
      %v667 = vmax.f32 %v613, 0.0
      %v668 = vmax.f32 %v616, 0.0
      %v669 = vmax.f32 %v621, 0.0
      %v670 = vmax.f32 %v624, 0.0
      %v671 = vmax.f32 %v629, 0.0
      %v672 = vmax.f32 %v632, 0.0
      %v673 = vmax.f32 %v637, 0.0
      %v674 = vmax.f32 %v640, 0.0
      %v675 = vpack.c.bf16 %v644, %v643
      %v676 = vpack.c.bf16 %v646, %v645
      %v677 = vpack.c.bf16 %v648, %v647
      %v678 = vpack.c.bf16 %v650, %v649
      %v679 = vpack.c.bf16 %v652, %v651
      %v680 = vpack.c.bf16 %v654, %v653
      %v681 = vpack.c.bf16 %v656, %v655
      %v682 = vpack.c.bf16 %v658, %v657
      %v683 = vpack.c.bf16 %v660, %v659
      %v684 = vpack.c.bf16 %v662, %v661
      %v685 = vpack.c.bf16 %v664, %v663
      %v686 = vpack.c.bf16 %v666, %v665
      %v687 = vpack.c.bf16 %v668, %v667
      %v688 = vpack.c.bf16 %v670, %v669
      %v689 = vpack.c.bf16 %v672, %v671
      %v690 = vpack.c.bf16 %v674, %v673
      %v691 = vld [vmem:[%s3] sm:$0xf]
      %v692 = vld [vmem:[%s3 + $0x4] sm:$0xf]
      %v693 = vld [vmem:[%s3 + $0x8] sm:$0xf]
      %v694 = vld [vmem:[%s3 + $0xc] sm:$0xf]
      %v695 = vld [vmem:[%s3 + $0x10] sm:$0xf]
      %v696 = vld [vmem:[%s3 + $0x14] sm:$0xf]
      %v697 = vld [vmem:[%s3 + $0x18] sm:$0xf]
      %v698 = vld [vmem:[%s3 + $0x1c] sm:$0xf]
      %v699 = vld [vmem:[%s3 + $0x20] sm:$0xf]
      %v700 = vld [vmem:[%s3 + $0x24] sm:$0xf]
      %v701 = vld [vmem:[%s3 + $0x28] sm:$0xf]
      %v702 = vld [vmem:[%s3 + $0x2c] sm:$0xf]
      %v703 = vld [vmem:[%s3 + $0x30] sm:$0xf]
      %v704 = vld [vmem:[%s3 + $0x34] sm:$0xf]
      %v705 = vld [vmem:[%s3 + $0x38] sm:$0xf]
      %v706 = vld [vmem:[%s3 + $0x3c] sm:$0xf]
      %v707 = vld [vmem:[%s4] sm:$0x1]
      %v709 = vlaneseq
      %v710 = vshrl.u32 %v709, 7
      %v711 = vsub.s32 0, %v710
      %v712 = vrot.slane %v707, %v711
      %v730 = vunpack.c.l.b16 %v691
      %v731 = vunpack.c.l.b16 %v692
      %v732 = vunpack.c.l.b16 %v693
      %v733 = vunpack.c.l.b16 %v694
      %v734 = vunpack.c.l.b16 %v695
      %v735 = vunpack.c.l.b16 %v696
      %v736 = vunpack.c.l.b16 %v697
      %v737 = vunpack.c.l.b16 %v698
      %v738 = vunpack.c.l.b16 %v699
      %v739 = vunpack.c.l.b16 %v700
      %v740 = vunpack.c.l.b16 %v701
      %v741 = vunpack.c.l.b16 %v702
      %v742 = vunpack.c.l.b16 %v703
      %v743 = vunpack.c.l.b16 %v704
      %v744 = vunpack.c.l.b16 %v705
      %v745 = vunpack.c.l.b16 %v706
      %v746 = vpack.c.b16 %v731, %v730
      %v747 = vpack.c.b16 %v733, %v732
      %v748 = vpack.c.b16 %v735, %v734
      %v749 = vpack.c.b16 %v737, %v736
      %v750 = vpack.c.b16 %v739, %v738
      %v751 = vpack.c.b16 %v741, %v740
      %v752 = vpack.c.b16 %v743, %v742
      %v753 = vpack.c.b16 %v745, %v744
      %762 = vmatprep.subr.bf16.mxu0 0
      %763 = vmatpush1.bf16.msra.mxu0 %v746
      %764 = vmatprep.subr.bf16.mxu0 0
      %765 = vmatpush1.bf16.msra.mxu0 %v747
      %766 = vmatprep.subr.bf16.mxu0 0
      %767 = vmatpush1.bf16.msra.mxu0 %v748
      %768 = vmatprep.subr.bf16.mxu0 0
      %769 = vmatpush1.bf16.msra.mxu0 %v749
      %770 = vmatprep.subr.bf16.mxu0 0
      %771 = vmatpush1.bf16.msra.mxu0 %v750
      %772 = vmatprep.subr.bf16.mxu0 0
      %773 = vmatpush1.bf16.msra.mxu0 %v751
      %774 = vmatprep.subr.bf16.mxu0 0
      %775 = vmatpush1.bf16.msra.mxu0 %v752
      %776 = vmatprep.subr.bf16.mxu0 0
      %777 = vmatpush1.bf16.msra.mxu0 %v753
      %778 = vmatprep.subr.bf16.mxu0 0
      %779 = vmatpush1.bf16.msra.mxu0 0
      %780 = vmatprep.subr.bf16.mxu0 0
      %781 = vmatpush1.bf16.msra.mxu0 0
      %782 = vmatprep.subr.bf16.mxu0 0
      %783 = vmatpush1.bf16.msra.mxu0 0
      %784 = vmatprep.subr.bf16.mxu0 0
      %785 = vmatpush1.bf16.msra.mxu0 0
      %786 = vmatprep.subr.bf16.mxu0 0
      %787 = vmatpush1.bf16.msra.mxu0 0
      %788 = vmatprep.subr.bf16.mxu0 0
      %789 = vmatpush1.bf16.msra.mxu0 0
      %790 = vmatprep.subr.bf16.mxu0 0
      %791 = vmatpush1.bf16.msra.mxu0 0
      %792 = vmatprep.subr.bf16.mxu0 0
      %793 = vmatpush1.bf16.msra.mxu0 0
      %794 = vmatprep.mubr.bf16.mxu0 0
      %795 = vmatmul.mubr.bf16.gmra.mrb[0].mxu0 %v675
      %v796 = vpop.f32.mrb[0].mxu0
      %v797 = vadd.f32 %v712, %v796
      %v798 = vpop.f32.mrb[0].mxu0
      %v799 = vpop.f32.mrb[0].mxu0
      %v800 = vadd.f32 %v712, %v799
      %v801 = vpop.f32.mrb[0].mxu0
      %802 = vmatprep.mubr.bf16.mxu0 0
      %803 = vmatmul.mubr.bf16.gmra.mrb[0].mxu0 %v676
      %v804 = vpop.f32.mrb[0].mxu0
      %v805 = vadd.f32 %v712, %v804
      %v806 = vpop.f32.mrb[0].mxu0
      %v807 = vpop.f32.mrb[0].mxu0
      %v808 = vadd.f32 %v712, %v807
      %v809 = vpop.f32.mrb[0].mxu0
      %810 = vmatprep.mubr.bf16.mxu0 0
      %811 = vmatmul.mubr.bf16.gmra.mrb[0].mxu0 %v677
      %v812 = vpop.f32.mrb[0].mxu0
      %v813 = vadd.f32 %v712, %v812
      %v814 = vpop.f32.mrb[0].mxu0
      %v815 = vpop.f32.mrb[0].mxu0
      %v816 = vadd.f32 %v712, %v815
      %v817 = vpop.f32.mrb[0].mxu0
      %818 = vmatprep.mubr.bf16.mxu0 0
      %819 = vmatmul.mubr.bf16.gmra.mrb[0].mxu0 %v678
      %v820 = vpop.f32.mrb[0].mxu0
      %v821 = vadd.f32 %v712, %v820
      %v822 = vpop.f32.mrb[0].mxu0
      %v823 = vpop.f32.mrb[0].mxu0
      %v824 = vadd.f32 %v712, %v823
      %v825 = vpop.f32.mrb[0].mxu0
      %826 = vmatprep.mubr.bf16.mxu0 0
      %827 = vmatmul.mubr.bf16.gmra.mrb[0].mxu0 %v679
      %v828 = vpop.f32.mrb[0].mxu0
      %v829 = vadd.f32 %v712, %v828
      %v830 = vpop.f32.mrb[0].mxu0
      %v831 = vpop.f32.mrb[0].mxu0
      %v832 = vadd.f32 %v712, %v831
      %v833 = vpop.f32.mrb[0].mxu0
      %834 = vmatprep.mubr.bf16.mxu0 0
      %835 = vmatmul.mubr.bf16.gmra.mrb[0].mxu0 %v680
      %v836 = vpop.f32.mrb[0].mxu0
      %v837 = vadd.f32 %v712, %v836
      %v838 = vpop.f32.mrb[0].mxu0
      %v839 = vpop.f32.mrb[0].mxu0
      %v840 = vadd.f32 %v712, %v839
      %v841 = vpop.f32.mrb[0].mxu0
      %842 = vmatprep.mubr.bf16.mxu0 0
      %843 = vmatmul.mubr.bf16.gmra.mrb[0].mxu0 %v681
      %v844 = vpop.f32.mrb[0].mxu0
      %v845 = vadd.f32 %v712, %v844
      %v846 = vpop.f32.mrb[0].mxu0
      %v847 = vpop.f32.mrb[0].mxu0
      %v848 = vadd.f32 %v712, %v847
      %v849 = vpop.f32.mrb[0].mxu0
      %850 = vmatprep.mubr.bf16.mxu0 0
      %851 = vmatmul.mubr.bf16.gmra.mrb[0].mxu0 %v682
      %v852 = vpop.f32.mrb[0].mxu0
      %v853 = vadd.f32 %v712, %v852
      %v854 = vpop.f32.mrb[0].mxu0
      %v855 = vpop.f32.mrb[0].mxu0
      %v856 = vadd.f32 %v712, %v855
      %v857 = vpop.f32.mrb[0].mxu0
      %858 = vmatprep.mubr.bf16.mxu0 0
      %859 = vmatmul.mubr.bf16.gmra.mrb[0].mxu0 %v683
      %v860 = vpop.f32.mrb[0].mxu0
      %v861 = vadd.f32 %v712, %v860
      %v862 = vpop.f32.mrb[0].mxu0
      %v863 = vpop.f32.mrb[0].mxu0
      %v864 = vadd.f32 %v712, %v863
      %v865 = vpop.f32.mrb[0].mxu0
      %866 = vmatprep.mubr.bf16.mxu0 0
      %867 = vmatmul.mubr.bf16.gmra.mrb[0].mxu0 %v684
      %v868 = vpop.f32.mrb[0].mxu0
      %v869 = vadd.f32 %v712, %v868
      %v870 = vpop.f32.mrb[0].mxu0
      %v871 = vpop.f32.mrb[0].mxu0
      %v872 = vadd.f32 %v712, %v871
      %v873 = vpop.f32.mrb[0].mxu0
      %874 = vmatprep.mubr.bf16.mxu0 0
      %875 = vmatmul.mubr.bf16.gmra.mrb[0].mxu0 %v685
      %v876 = vpop.f32.mrb[0].mxu0
      %v877 = vadd.f32 %v712, %v876
      %v878 = vpop.f32.mrb[0].mxu0
      %v879 = vpop.f32.mrb[0].mxu0
      %v880 = vadd.f32 %v712, %v879
      %v881 = vpop.f32.mrb[0].mxu0
      %882 = vmatprep.mubr.bf16.mxu0 0
      %883 = vmatmul.mubr.bf16.gmra.mrb[0].mxu0 %v686
      %v884 = vpop.f32.mrb[0].mxu0
      %v885 = vadd.f32 %v712, %v884
      %v886 = vpop.f32.mrb[0].mxu0
      %v887 = vpop.f32.mrb[0].mxu0
      %v888 = vadd.f32 %v712, %v887
      %v889 = vpop.f32.mrb[0].mxu0
      %890 = vmatprep.mubr.bf16.mxu0 0
      %891 = vmatmul.mubr.bf16.gmra.mrb[0].mxu0 %v687
      %v892 = vpop.f32.mrb[0].mxu0
      %v893 = vadd.f32 %v712, %v892
      %v894 = vpop.f32.mrb[0].mxu0
      %v895 = vpop.f32.mrb[0].mxu0
      %v896 = vadd.f32 %v712, %v895
      %v897 = vpop.f32.mrb[0].mxu0
      %898 = vmatprep.mubr.bf16.mxu0 0
      %899 = vmatmul.mubr.bf16.gmra.mrb[0].mxu0 %v688
      %v900 = vpop.f32.mrb[0].mxu0
      %v901 = vadd.f32 %v712, %v900
      %v902 = vpop.f32.mrb[0].mxu0
      %v903 = vpop.f32.mrb[0].mxu0
      %v904 = vadd.f32 %v712, %v903
      %v905 = vpop.f32.mrb[0].mxu0
      %906 = vmatprep.mubr.bf16.mxu0 0
      %907 = vmatmul.mubr.bf16.gmra.mrb[0].mxu0 %v689
      %v908 = vpop.f32.mrb[0].mxu0
      %v909 = vadd.f32 %v712, %v908
      %v910 = vpop.f32.mrb[0].mxu0
      %v911 = vpop.f32.mrb[0].mxu0
      %v912 = vadd.f32 %v712, %v911
      %v913 = vpop.f32.mrb[0].mxu0
      %914 = vmatprep.mubr.bf16.mxu0 0
      %915 = vmatmul.mubr.bf16.gmra.mrb[0].mxu0 %v690
      %v916 = vpop.f32.mrb[0].mxu0
      %v917 = vadd.f32 %v712, %v916
      %v918 = vpop.f32.mrb[0].mxu0
      %v919 = vpop.f32.mrb[0].mxu0
      %v920 = vadd.f32 %v712, %v919
      %v921 = vpop.f32.mrb[0].mxu0
      %922 = vdwg.mxu0
      %v923 = vmax.f32 %v797, 0.0
      %v924 = vmax.f32 %v800, 0.0
      %v925 = vmax.f32 %v805, 0.0
      %v926 = vmax.f32 %v808, 0.0
      %v927 = vmax.f32 %v813, 0.0
      %v928 = vmax.f32 %v816, 0.0
      %v929 = vmax.f32 %v821, 0.0
      %v930 = vmax.f32 %v824, 0.0
      %v931 = vmax.f32 %v829, 0.0
      %v932 = vmax.f32 %v832, 0.0
      %v933 = vmax.f32 %v837, 0.0
      %v934 = vmax.f32 %v840, 0.0
      %v935 = vmax.f32 %v845, 0.0
      %v936 = vmax.f32 %v848, 0.0
      %v937 = vmax.f32 %v853, 0.0
      %v938 = vmax.f32 %v856, 0.0
      %v939 = vmax.f32 %v861, 0.0
      %v940 = vmax.f32 %v864, 0.0
      %v941 = vmax.f32 %v869, 0.0
      %v942 = vmax.f32 %v872, 0.0
      %v943 = vmax.f32 %v877, 0.0
      %v944 = vmax.f32 %v880, 0.0
      %v945 = vmax.f32 %v885, 0.0
      %v946 = vmax.f32 %v888, 0.0
      %v947 = vmax.f32 %v893, 0.0
      %v948 = vmax.f32 %v896, 0.0
      %v949 = vmax.f32 %v901, 0.0
      %v950 = vmax.f32 %v904, 0.0
      %v951 = vmax.f32 %v909, 0.0
      %v952 = vmax.f32 %v912, 0.0
      %v953 = vmax.f32 %v917, 0.0
      %v954 = vmax.f32 %v920, 0.0
      %v955 = vpack.c.bf16 %v924, %v923
      %v956 = vpack.c.bf16 %v926, %v925
      %v957 = vpack.c.bf16 %v928, %v927
      %v958 = vpack.c.bf16 %v930, %v929
      %v959 = vpack.c.bf16 %v932, %v931
      %v960 = vpack.c.bf16 %v934, %v933
      %v961 = vpack.c.bf16 %v936, %v935
      %v962 = vpack.c.bf16 %v938, %v937
      %v963 = vpack.c.bf16 %v940, %v939
      %v964 = vpack.c.bf16 %v942, %v941
      %v965 = vpack.c.bf16 %v944, %v943
      %v966 = vpack.c.bf16 %v946, %v945
      %v967 = vpack.c.bf16 %v948, %v947
      %v968 = vpack.c.bf16 %v950, %v949
      %v969 = vpack.c.bf16 %v952, %v951
      %v970 = vpack.c.bf16 %v954, %v953
      %v971 = vld [vmem:[%s5] sm:$0xf]
      %v972 = vld [vmem:[%s5 + $0x4] sm:$0xf]
      %v973 = vld [vmem:[%s5 + $0x8] sm:$0xf]
      %v974 = vld [vmem:[%s5 + $0xc] sm:$0xf]
      %v975 = vld [vmem:[%s5 + $0x10] sm:$0xf]
      %v976 = vld [vmem:[%s5 + $0x14] sm:$0xf]
      %v977 = vld [vmem:[%s5 + $0x18] sm:$0xf]
      %v978 = vld [vmem:[%s5 + $0x1c] sm:$0xf]
      %v979 = vld [vmem:[%s5 + $0x20] sm:$0xf]
      %v980 = vld [vmem:[%s5 + $0x24] sm:$0xf]
      %v981 = vld [vmem:[%s5 + $0x28] sm:$0xf]
      %v982 = vld [vmem:[%s5 + $0x2c] sm:$0xf]
      %v983 = vld [vmem:[%s5 + $0x30] sm:$0xf]
      %v984 = vld [vmem:[%s5 + $0x34] sm:$0xf]
      %v985 = vld [vmem:[%s5 + $0x38] sm:$0xf]
      %v986 = vld [vmem:[%s5 + $0x3c] sm:$0xf]
      %v987 = vld [vmem:[%s6] sm:$0x1]
      %v989 = vlaneseq
      %v990 = vshrl.u32 %v989, 7
      %v991 = vsub.s32 0, %v990
      %v992 = vrot.slane %v987, %v991
      %v1010 = vunpack.c.l.b16 %v971
      %v1011 = vunpack.c.l.b16 %v972
      %v1012 = vunpack.c.l.b16 %v973
      %v1013 = vunpack.c.l.b16 %v974
      %v1014 = vunpack.c.l.b16 %v975
      %v1015 = vunpack.c.l.b16 %v976
      %v1016 = vunpack.c.l.b16 %v977
      %v1017 = vunpack.c.l.b16 %v978
      %v1018 = vunpack.c.l.b16 %v979
      %v1019 = vunpack.c.l.b16 %v980
      %v1020 = vunpack.c.l.b16 %v981
      %v1021 = vunpack.c.l.b16 %v982
      %v1022 = vunpack.c.l.b16 %v983
      %v1023 = vunpack.c.l.b16 %v984
      %v1024 = vunpack.c.l.b16 %v985
      %v1025 = vunpack.c.l.b16 %v986
      %v1026 = vpack.c.b16 %v1011, %v1010
      %v1027 = vpack.c.b16 %v1013, %v1012
      %v1028 = vpack.c.b16 %v1015, %v1014
      %v1029 = vpack.c.b16 %v1017, %v1016
      %v1030 = vpack.c.b16 %v1019, %v1018
      %v1031 = vpack.c.b16 %v1021, %v1020
      %v1032 = vpack.c.b16 %v1023, %v1022
      %v1033 = vpack.c.b16 %v1025, %v1024
      %1042 = vmatprep.subr.bf16.mxu0 0
      %1043 = vmatpush1.bf16.msra.mxu0 %v1026
      %1044 = vmatprep.subr.bf16.mxu0 0
      %1045 = vmatpush1.bf16.msra.mxu0 %v1027
      %1046 = vmatprep.subr.bf16.mxu0 0
      %1047 = vmatpush1.bf16.msra.mxu0 %v1028
      %1048 = vmatprep.subr.bf16.mxu0 0
      %1049 = vmatpush1.bf16.msra.mxu0 %v1029
      %1050 = vmatprep.subr.bf16.mxu0 0
      %1051 = vmatpush1.bf16.msra.mxu0 %v1030
      %1052 = vmatprep.subr.bf16.mxu0 0
      %1053 = vmatpush1.bf16.msra.mxu0 %v1031
      %1054 = vmatprep.subr.bf16.mxu0 0
      %1055 = vmatpush1.bf16.msra.mxu0 %v1032
      %1056 = vmatprep.subr.bf16.mxu0 0
      %1057 = vmatpush1.bf16.msra.mxu0 %v1033
      %1058 = vmatprep.subr.bf16.mxu0 0
      %1059 = vmatpush1.bf16.msra.mxu0 0
      %1060 = vmatprep.subr.bf16.mxu0 0
      %1061 = vmatpush1.bf16.msra.mxu0 0
      %1062 = vmatprep.subr.bf16.mxu0 0
      %1063 = vmatpush1.bf16.msra.mxu0 0
      %1064 = vmatprep.subr.bf16.mxu0 0
      %1065 = vmatpush1.bf16.msra.mxu0 0
      %1066 = vmatprep.subr.bf16.mxu0 0
      %1067 = vmatpush1.bf16.msra.mxu0 0
      %1068 = vmatprep.subr.bf16.mxu0 0
      %1069 = vmatpush1.bf16.msra.mxu0 0
      %1070 = vmatprep.subr.bf16.mxu0 0
      %1071 = vmatpush1.bf16.msra.mxu0 0
      %1072 = vmatprep.subr.bf16.mxu0 0
      %1073 = vmatpush1.bf16.msra.mxu0 0
      %1074 = vmatprep.mubr.bf16.mxu0 0
      %1075 = vmatmul.mubr.bf16.gmra.mrb[0].mxu0 %v955
      %v1076 = vpop.f32.mrb[0].mxu0
      %v1077 = vadd.f32 %v992, %v1076
      %v1078 = vpop.f32.mrb[0].mxu0
      %v1079 = vpop.f32.mrb[0].mxu0
      %v1080 = vadd.f32 %v992, %v1079
      %v1081 = vpop.f32.mrb[0].mxu0
      %1082 = vmatprep.mubr.bf16.mxu0 0
      %1083 = vmatmul.mubr.bf16.gmra.mrb[0].mxu0 %v956
      %v1084 = vpop.f32.mrb[0].mxu0
      %v1085 = vadd.f32 %v992, %v1084
      %v1086 = vpop.f32.mrb[0].mxu0
      %v1087 = vpop.f32.mrb[0].mxu0
      %v1088 = vadd.f32 %v992, %v1087
      %v1089 = vpop.f32.mrb[0].mxu0
      %1090 = vmatprep.mubr.bf16.mxu0 0
      %1091 = vmatmul.mubr.bf16.gmra.mrb[0].mxu0 %v957
      %v1092 = vpop.f32.mrb[0].mxu0
      %v1093 = vadd.f32 %v992, %v1092
      %v1094 = vpop.f32.mrb[0].mxu0
      %v1095 = vpop.f32.mrb[0].mxu0
      %v1096 = vadd.f32 %v992, %v1095
      %v1097 = vpop.f32.mrb[0].mxu0
      %1098 = vmatprep.mubr.bf16.mxu0 0
      %1099 = vmatmul.mubr.bf16.gmra.mrb[0].mxu0 %v958
      %v1100 = vpop.f32.mrb[0].mxu0
      %v1101 = vadd.f32 %v992, %v1100
      %v1102 = vpop.f32.mrb[0].mxu0
      %v1103 = vpop.f32.mrb[0].mxu0
      %v1104 = vadd.f32 %v992, %v1103
      %v1105 = vpop.f32.mrb[0].mxu0
      %1106 = vmatprep.mubr.bf16.mxu0 0
      %1107 = vmatmul.mubr.bf16.gmra.mrb[0].mxu0 %v959
      %v1108 = vpop.f32.mrb[0].mxu0
      %v1109 = vadd.f32 %v992, %v1108
      %v1110 = vpop.f32.mrb[0].mxu0
      %v1111 = vpop.f32.mrb[0].mxu0
      %v1112 = vadd.f32 %v992, %v1111
      %v1113 = vpop.f32.mrb[0].mxu0
      %1114 = vmatprep.mubr.bf16.mxu0 0
      %1115 = vmatmul.mubr.bf16.gmra.mrb[0].mxu0 %v960
      %v1116 = vpop.f32.mrb[0].mxu0
      %v1117 = vadd.f32 %v992, %v1116
      %v1118 = vpop.f32.mrb[0].mxu0
      %v1119 = vpop.f32.mrb[0].mxu0
      %v1120 = vadd.f32 %v992, %v1119
      %v1121 = vpop.f32.mrb[0].mxu0
      %1122 = vmatprep.mubr.bf16.mxu0 0
      %1123 = vmatmul.mubr.bf16.gmra.mrb[0].mxu0 %v961
      %v1124 = vpop.f32.mrb[0].mxu0
      %v1125 = vadd.f32 %v992, %v1124
      %v1126 = vpop.f32.mrb[0].mxu0
      %v1127 = vpop.f32.mrb[0].mxu0
      %v1128 = vadd.f32 %v992, %v1127
      %v1129 = vpop.f32.mrb[0].mxu0
      %1130 = vmatprep.mubr.bf16.mxu0 0
      %1131 = vmatmul.mubr.bf16.gmra.mrb[0].mxu0 %v962
      %v1132 = vpop.f32.mrb[0].mxu0
      %v1133 = vadd.f32 %v992, %v1132
      %v1134 = vpop.f32.mrb[0].mxu0
      %v1135 = vpop.f32.mrb[0].mxu0
      %v1136 = vadd.f32 %v992, %v1135
      %v1137 = vpop.f32.mrb[0].mxu0
      %1138 = vmatprep.mubr.bf16.mxu0 0
      %1139 = vmatmul.mubr.bf16.gmra.mrb[0].mxu0 %v963
      %v1140 = vpop.f32.mrb[0].mxu0
      %v1141 = vadd.f32 %v992, %v1140
      %v1142 = vpop.f32.mrb[0].mxu0
      %v1143 = vpop.f32.mrb[0].mxu0
      %v1144 = vadd.f32 %v992, %v1143
      %v1145 = vpop.f32.mrb[0].mxu0
      %1146 = vmatprep.mubr.bf16.mxu0 0
      %1147 = vmatmul.mubr.bf16.gmra.mrb[0].mxu0 %v964
      %v1148 = vpop.f32.mrb[0].mxu0
      %v1149 = vadd.f32 %v992, %v1148
      %v1150 = vpop.f32.mrb[0].mxu0
      %v1151 = vpop.f32.mrb[0].mxu0
      %v1152 = vadd.f32 %v992, %v1151
      %v1153 = vpop.f32.mrb[0].mxu0
      %1154 = vmatprep.mubr.bf16.mxu0 0
      %1155 = vmatmul.mubr.bf16.gmra.mrb[0].mxu0 %v965
      %v1156 = vpop.f32.mrb[0].mxu0
      %v1157 = vadd.f32 %v992, %v1156
      %v1158 = vpop.f32.mrb[0].mxu0
      %v1159 = vpop.f32.mrb[0].mxu0
      %v1160 = vadd.f32 %v992, %v1159
      %v1161 = vpop.f32.mrb[0].mxu0
      %1162 = vmatprep.mubr.bf16.mxu0 0
      %1163 = vmatmul.mubr.bf16.gmra.mrb[0].mxu0 %v966
      %v1164 = vpop.f32.mrb[0].mxu0
      %v1165 = vadd.f32 %v992, %v1164
      %v1166 = vpop.f32.mrb[0].mxu0
      %v1167 = vpop.f32.mrb[0].mxu0
      %v1168 = vadd.f32 %v992, %v1167
      %v1169 = vpop.f32.mrb[0].mxu0
      %1170 = vmatprep.mubr.bf16.mxu0 0
      %1171 = vmatmul.mubr.bf16.gmra.mrb[0].mxu0 %v967
      %v1172 = vpop.f32.mrb[0].mxu0
      %v1173 = vadd.f32 %v992, %v1172
      %v1174 = vpop.f32.mrb[0].mxu0
      %v1175 = vpop.f32.mrb[0].mxu0
      %v1176 = vadd.f32 %v992, %v1175
      %v1177 = vpop.f32.mrb[0].mxu0
      %1178 = vmatprep.mubr.bf16.mxu0 0
      %1179 = vmatmul.mubr.bf16.gmra.mrb[0].mxu0 %v968
      %v1180 = vpop.f32.mrb[0].mxu0
      %v1181 = vadd.f32 %v992, %v1180
      %v1182 = vpop.f32.mrb[0].mxu0
      %v1183 = vpop.f32.mrb[0].mxu0
      %v1184 = vadd.f32 %v992, %v1183
      %v1185 = vpop.f32.mrb[0].mxu0
      %1186 = vmatprep.mubr.bf16.mxu0 0
      %1187 = vmatmul.mubr.bf16.gmra.mrb[0].mxu0 %v969
      %v1188 = vpop.f32.mrb[0].mxu0
      %v1189 = vadd.f32 %v992, %v1188
      %v1190 = vpop.f32.mrb[0].mxu0
      %v1191 = vpop.f32.mrb[0].mxu0
      %v1192 = vadd.f32 %v992, %v1191
      %v1193 = vpop.f32.mrb[0].mxu0
      %1194 = vmatprep.mubr.bf16.mxu0 0
      %1195 = vmatmul.mubr.bf16.gmra.mrb[0].mxu0 %v970
      %v1196 = vpop.f32.mrb[0].mxu0
      %v1197 = vadd.f32 %v992, %v1196
      %v1198 = vpop.f32.mrb[0].mxu0
      %v1199 = vpop.f32.mrb[0].mxu0
      %v1200 = vadd.f32 %v992, %v1199
      %v1201 = vpop.f32.mrb[0].mxu0
      %1202 = vdwg.mxu0
      %1203 = vst [vmem:[%s280] sm:$0xff] %v1077
      %1204 = vst [vmem:[%s280 + $0x8] sm:$0xff] %v1080
      %1205 = vst [vmem:[%s280 + $0x10] sm:$0xff] %v1085
      %1206 = vst [vmem:[%s280 + $0x18] sm:$0xff] %v1088
      %1207 = vst [vmem:[%s280 + $0x20] sm:$0xff] %v1093
      %1208 = vst [vmem:[%s280 + $0x28] sm:$0xff] %v1096
      %1209 = vst [vmem:[%s280 + $0x30] sm:$0xff] %v1101
      %1210 = vst [vmem:[%s280 + $0x38] sm:$0xff] %v1104
      %1211 = vst [vmem:[%s280 + $0x40] sm:$0xff] %v1109
      %1212 = vst [vmem:[%s280 + $0x48] sm:$0xff] %v1112
      %1213 = vst [vmem:[%s280 + $0x50] sm:$0xff] %v1117
      %1214 = vst [vmem:[%s280 + $0x58] sm:$0xff] %v1120
      %1215 = vst [vmem:[%s280 + $0x60] sm:$0xff] %v1125
      %1216 = vst [vmem:[%s280 + $0x68] sm:$0xff] %v1128
      %1217 = vst [vmem:[%s280 + $0x70] sm:$0xff] %v1133
      %1218 = vst [vmem:[%s280 + $0x78] sm:$0xff] %v1136
      %1219 = vst [vmem:[%s280 + $0x80] sm:$0xff] %v1141
      %1220 = vst [vmem:[%s280 + $0x88] sm:$0xff] %v1144
      %1221 = vst [vmem:[%s280 + $0x90] sm:$0xff] %v1149
      %1222 = vst [vmem:[%s280 + $0x98] sm:$0xff] %v1152
      %1223 = vst [vmem:[%s280 + $0xa0] sm:$0xff] %v1157
      %1224 = vst [vmem:[%s280 + $0xa8] sm:$0xff] %v1160
      %1225 = vst [vmem:[%s280 + $0xb0] sm:$0xff] %v1165
      %1226 = vst [vmem:[%s280 + $0xb8] sm:$0xff] %v1168
      %1227 = vst [vmem:[%s280 + $0xc0] sm:$0xff] %v1173
      %1228 = vst [vmem:[%s280 + $0xc8] sm:$0xff] %v1176
      %1229 = vst [vmem:[%s280 + $0xd0] sm:$0xff] %v1181
      %1230 = vst [vmem:[%s280 + $0xd8] sm:$0xff] %v1184
      %1231 = vst [vmem:[%s280 + $0xe0] sm:$0xff] %v1189
      %1232 = vst [vmem:[%s280 + $0xe8] sm:$0xff] %v1192
      %1233 = vst [vmem:[%s280 + $0xf0] sm:$0xff] %v1197
      %1234 = vst [vmem:[%s280 + $0xf8] sm:$0xff] %v1200
      %s1235 = smul.u32 32, %s18
      %p1236 = scmp.lt.s32.totalorder %s1235, 63
      %s1237 = scalar_select %p1236, %s1235, 63
      %s1238 = smul.addr %s1237, 8
      %s1239 = scalar_lea.vmem %s7, %s1238
      // Predicated region
      $region49: #{mlp_forward.1} parent=47 // pred_check
        %p1240 = pneg %p188
      $region50: #{mlp_forward.1} parent=47 // pred_check_branch
        %1242 = sbr.rel (%p1240) target = $region52
      $region51: #{mlp_forward.1} parent=47 // pred_region
        %s1243 = smul.u32 32, %s18
      $region52: #{mlp_forward.1} parent=47 // pred_fallthru
        _
    $region48: #{mlp_forward.1} parent=5 // pred_fallthru
      _
    %p1244 = scmp.le.s32.totalorder 2, %s13
    // Predicated region
    $region53: #{mlp_forward.1} parent=5 // pred_check
      %p1245 = pneg %p1244
    $region54: #{mlp_forward.1} parent=5 // pred_check_branch
      %1247 = sbr.rel (%p1245) target = $region56
    $region55: #{mlp_forward.1} parent=5 // pred_region
      %s1248 = ssub.s32 %s13, 2
      // Predicated region
      $region57: #{mlp_forward.1} parent=55 // pred_check
        %p1249 = pneg %p194
      $region58: #{mlp_forward.1} parent=55 // pred_check_branch
        %1251 = sbr.rel (%p1249) target = $region60
      $region59: #{mlp_forward.1} parent=55 // pred_region
        %s1252 = smul.u32 32, %s19
        %p1253 = scmp.lt.s32.totalorder %s1252, 63
        %s1254 = scalar_select %p1253, %s1252, 63
        %s1255 = smul.addr %s1254, 8
        %s1256 = scalar_lea.vmem %s7, %s1255
      $region60: #{mlp_forward.1} parent=55 // pred_fallthru
        _
    $region56: #{mlp_forward.1} parent=5 // pred_fallthru
      _
  $region6: #{mlp_forward.1} parent=0 // loop_footer
    %s17 = sadd.s32 1, %s13
  $region7: #{mlp_forward.1} parent=0 // loop_footer_branch
    %12 = sbr.rel target = $region3
  $region8: #{mlp_forward.1} parent=0 // loop_exit
    _

</llo_original>
